<compile_context>
chip_gen: v5e
topology: v5e:2x2
jax: 0.10.0
libtpu: 0.0.40
codegen_flags: <defaults>
</compile_context>

<pallas_src>
import numpy as np
import jax
import jax.numpy as jnp
from jax.experimental import pallas as pl
from jax.experimental.pallas import tpu as pltpu


def _round_up(x, m):
    return ((x + m - 1) // m) * m


def _build_params(d_model):
    """(4, D) table: rows 0-2 hold the per-column coefficient 1500/f applied to
    that column's coordinate (zero elsewhere), row 3 holds the phase
    (pi/2 on cos columns) so cos(a) is evaluated as sin(a + pi/2)."""
    n_seg = d_model // 6
    D = 6 * n_seg
    W = np.zeros((4, D), dtype=np.float64)
    for j in range(D):
        seg, k = divmod(j, 6)
        coord = k % 3          # [sin x0, sin x1, sin x2, cos x0, cos x1, cos x2]
        is_cos = k >= 3
        W[coord, j] = 1500.0 / (10000.0 ** (6.0 * seg / d_model))
        W[3, j] = np.pi / 2.0 if is_cos else 0.0
    return jnp.asarray(W, dtype=jnp.float32)


def _vmem_capacity_bytes():
    try:
        cap = getattr(pltpu.get_tpu_info(), "vmem_capacity_bytes", None)
        if cap:
            return int(cap)
    except Exception:
        pass
    return 64 << 20            # smallest physical VMEM across v5e/v6e/v7x


def _make_kernel(tile_m, n_valid, angle_on_mxu):
    def _encode(x, w):
        if angle_on_mxu:
            # Offload the angle accumulation to the (otherwise idle) MXU.
            angle = jnp.dot(x, w[0:3, :], preferred_element_type=jnp.float32,
                            precision=jax.lax.Precision.HIGHEST) + w[3:4, :]
        else:
            angle = (x[:, 0:1] * w[0:1, :]
                     + x[:, 1:2] * w[1:2, :]
                     + x[:, 2:3] * w[2:3, :]
                     + w[3:4, :])
        return jnp.sin(angle)          # cos columns folded in via +pi/2 phase

    def kernel(x_ref, w_ref, o_ref):
        pid = pl.program_id(0)
        block_start = pid * tile_m
        block_end = block_start + tile_m

        @pl.when(block_end <= n_valid)                 # interior tile: no masking
        def _():
            o_ref[...] = _encode(x_ref[...], w_ref[...]).astype(o_ref.dtype)

        @pl.when(jnp.logical_and(block_start < n_valid, block_end > n_valid))
        def _():                                       # boundary tile: zero pad rows
            enc = _encode(x_ref[...], w_ref[...])
            rows = block_start + jax.lax.broadcasted_iota(
                jnp.int32, (tile_m, 1), 0)
            o_ref[...] = jnp.where(rows < n_valid, enc,
                                   jnp.zeros_like(enc)).astype(o_ref.dtype)

        @pl.when(block_start >= n_valid)               # all-padding tile: skip sin
        def _():
            o_ref[...] = jnp.zeros(o_ref.shape, o_ref.dtype)

    return kernel


def d3_positional_encoder4(x, d_model=512, n_padding=0, *, tile_m=1024,
                           out_dtype=jnp.float32, num_tensorcores=2,
                           angle_on_mxu=False):
    """Pallas implementation of D3PositionalEncoder4.forward.

    x: (N, 3). Returns (N + n_padding + 1, 6 * (d_model // 6)) in out_dtype.
    float32 matches the PyTorch module; bfloat16 halves the HBM writeback
    (the kernel is write-bound) and is recommended when the consumer allows it.
    num_tensorcores only affects grid-shard balance (2 covers v7x megacore and
    costs ~nothing on single-TC v5e/v6e)."""
    assert x.ndim == 2 and x.shape[1] == 3
    assert d_model >= 6, "d_model must be >= 6 (n_seg = d_model // 6 >= 1)"
    N = int(x.shape[0])
    n_seg = d_model // 6
    D = 6 * n_seg
    n_out = N + n_padding + 1
    out_itemsize = np.dtype(out_dtype).itemsize

    if N == 0:                 # padding rows only: avoid an OOB DMA read of empty x
        return jnp.zeros((n_out, D), out_dtype)

    # ---- generation-aware tiling -------------------------------------------
    sub = 8 * max(1, 4 // out_itemsize)      # native sublane granule (f32:8, bf16:16)
    d_lanes = _round_up(D, 128)              # lane-padded width in VMEM
    vmem_cap = _vmem_capacity_bytes()
    budget = min(vmem_cap // 2, 64 << 20)    # leave headroom on every generation
    # per-row VMEM cost: double-buffered output block + double-buffered,
    # lane-padded (tm, 3) -> (tm, 128) f32 x block
    row_bytes = 2 * d_lanes * out_itemsize + 2 * 128 * 4
    tm_vmem = max(sub, ((budget - (64 << 10)) // row_bytes) // sub * sub)
    tm = max(sub, (min(int(tile_m), tm_vmem) // sub) * sub)

    nb = pl.cdiv(n_out, tm)
    if num_tensorcores > 1 and n_out >= num_tensorcores * 512:
        nb = max(nb, num_tensorcores)        # give every v7x core real work
    if num_tensorcores > 1 and nb > 1:
        nb = _round_up(nb, num_tensorcores)  # balanced megacore sharding
    tm = max(sub, _round_up(pl.cdiv(n_out, nb), sub))
    grid = (pl.cdiv(n_out, tm),)

    est_vmem = (2 * tm * d_lanes * out_itemsize   # output blocks (double-buffered)
                + 2 * tm * 128 * 4                # x blocks, lane-padded to 128
                + 2 * 8 * d_lanes * 4)            # W table (sublane-padded)
    vmem_limit = int(min(vmem_cap, max(est_vmem + (4 << 20), 16 << 20)))

    W = _build_params(d_model)

    # Blocks made entirely of padding rows may lie past the end of x; clamp the
    # input block index so their DMA stays in bounds (contents are unused).
    last_x_block = max(pl.cdiv(N, tm) - 1, 0)

    cost = pl.CostEstimate(
        flops=7 * n_out * D,                  # 3 mul + 3 add + select/cast per elem
        transcendentals=n_out * D,
        bytes_accessed=n_out * D * out_itemsize + N * 3 * 4 + 4 * D * 4)

    return pl.pallas_call(
        _make_kernel(tm, N, angle_on_mxu),
        out_shape=jax.ShapeDtypeStruct((n_out, D), out_dtype),
        grid_spec=pltpu.PrefetchScalarGridSpec(
            num_scalar_prefetch=0,
            grid=grid,
            in_specs=[
                pl.BlockSpec((tm, 3), lambda i: (jnp.minimum(i, last_x_block), 0)),
                pl.BlockSpec((4, D), lambda i: (0, 0)),
            ],
            out_specs=pl.BlockSpec((tm, D), lambda i: (i, 0)),
        ),
        compiler_params=pltpu.CompilerParams(
            dimension_semantics=("parallel",),
            vmem_limit_bytes=vmem_limit),
        cost_estimate=cost,
    )(x.astype(jnp.float32), W)


def _reference(x, d_model=512, n_padding=0):
    """Pure-JAX reference mimicking the PyTorch forward exactly."""
    n_seg = d_model // 6
    xs = x.astype(jnp.float32) * 1500.0
    cols = []
    for i in range(n_seg):
        f = 10000.0 ** (6.0 * i / d_model)
        cols.append(jnp.stack(
            [jnp.sin(xs[:, 0] / f), jnp.sin(xs[:, 1] / f), jnp.sin(xs[:, 2] / f),
             jnp.cos(xs[:, 0] / f), jnp.cos(xs[:, 1] / f), jnp.cos(xs[:, 2] / f)],
            axis=1))
    out = jnp.concatenate(cols, axis=1)
    return jnp.concatenate(
        [out, jnp.zeros((n_padding + 1, out.shape[1]), out.dtype)], axis=0)


if __name__ == "__main__":
    key = jax.random.PRNGKey(0)
    d_model = 48                       # small, divisible by 6 -> D = 48
    # keep |x * 1500| moderate so the f32 sin comparison is well conditioned
    cases = [
        dict(N=16, n_padding=0,  tile_m=1024, out_dtype=jnp.float32,  tol=2e-4),
        dict(N=20, n_padding=5,  tile_m=1024, out_dtype=jnp.float32,  tol=2e-4),
        # tiny tiles: exercise interior / boundary / all-padding branches and a
        # multi-block (megacore-balanced) grid
        dict(N=16, n_padding=20, tile_m=8,    out_dtype=jnp.float32,  tol=2e-4),
        # recommended fast path when the consumer tolerates bf16 output
        dict(N=20, n_padding=5,  tile_m=1024, out_dtype=jnp.bfloat16, tol=1.5e-2),
    ]
    for c in cases:
        N, n_padding = c["N"], c["n_padding"]
        x = jax.random.normal(jax.random.fold_in(key, N + 31 * n_padding),
                              (N, 3), dtype=jnp.float32) * 0.01
        out = jax.block_until_ready(
            d3_positional_encoder4(x, d_model=d_model, n_padding=n_padding,
                                   tile_m=c["tile_m"], out_dtype=c["out_dtype"]))
        ref = _reference(x, d_model=d_model, n_padding=n_padding)
        assert out.shape == (N + n_padding + 1, 6 * (d_model // 6)), out.shape
        np.testing.assert_allclose(np.asarray(out).astype(np.float32),
                                   np.asarray(ref), rtol=c["tol"], atol=c["tol"])

    # N == 0: output is padding rows only (no kernel launch, guarded path)
    out0 = jax.block_until_ready(
        d3_positional_encoder4(jnp.zeros((0, 3), jnp.float32),
                               d_model=d_model, n_padding=3))
    assert out0.shape == (4, 48) and not np.any(np.asarray(out0))

    print("KERNEL_OK")
</pallas_src>

<mosaic_0001>
module attributes {stable_mosaic.version = 11 : i64} {
  func.func @kernel(%arg0: i32, %arg1: memref<24x3xf32, #tpu.memory_space<vmem>>, %arg2: memref<4x48xf32, #tpu.memory_space<vmem>>, %arg3: memref<24x48xf32, #tpu.memory_space<vmem>>) attributes {dimension_semantics = [#tpu.dimension_semantics<parallel>], iteration_bounds = array<i64: 1>, scalar_prefetch = 0 : i64, scratch_operands = 0 : i64, tpu.core_type = #tpu.core_type<tc>, window_params = [{transform_indices = @transform_0, window_bounds = array<i64: 24, 3>}, {pipeline_mode = #tpu.pipeline_mode<synchronous>, transform_indices = @transform_1, window_bounds = array<i64: 4, 48>}, {transform_indices = @transform_2, window_bounds = array<i64: 24, 48>}]} {
    %c24_i32 = arith.constant 24 : i32
    %0 = arith.muli %arg0, %c24_i32 : i32
    %c24_i32_0 = arith.constant 24 : i32
    %1 = arith.addi %0, %c24_i32_0 : i32
    %c16_i32 = arith.constant 16 : i32
    %2 = arith.cmpi sle, %1, %c16_i32 : i32
    %3 = arith.extui %2 : i1 to i32
    %c0_i32 = arith.constant 0 : i32
    %4 = arith.cmpi ne, %3, %c0_i32 : i32
    scf.if %4 {
      %c0 = arith.constant 0 : index
      %c0_6 = arith.constant 0 : index
      %13 = vector.load %arg1[%c0, %c0_6] : memref<24x3xf32, #tpu.memory_space<vmem>>, vector<24x3xf32>
      %c0_7 = arith.constant 0 : index
      %c0_8 = arith.constant 0 : index
      %14 = vector.load %arg2[%c0_7, %c0_8] : memref<4x48xf32, #tpu.memory_space<vmem>>, vector<4x48xf32>
      %15 = vector.extract_strided_slice %13 {offsets = [0, 0], sizes = [24, 1], strides = [1, 1]} : vector<24x3xf32> to vector<24x1xf32>
      %16 = vector.extract_strided_slice %14 {offsets = [0, 0], sizes = [1, 48], strides = [1, 1]} : vector<4x48xf32> to vector<1x48xf32>
      %17 = vector.broadcast %15 : vector<24x1xf32> to vector<24x48xf32>
      %18 = vector.broadcast %16 : vector<1x48xf32> to vector<24x48xf32>
      %19 = arith.mulf %17, %18 : vector<24x48xf32>
      %20 = vector.extract_strided_slice %13 {offsets = [0, 1], sizes = [24, 1], strides = [1, 1]} : vector<24x3xf32> to vector<24x1xf32>
      %21 = vector.extract_strided_slice %14 {offsets = [1, 0], sizes = [1, 48], strides = [1, 1]} : vector<4x48xf32> to vector<1x48xf32>
      %22 = vector.broadcast %20 : vector<24x1xf32> to vector<24x48xf32>
      %23 = vector.broadcast %21 : vector<1x48xf32> to vector<24x48xf32>
      %24 = arith.mulf %22, %23 : vector<24x48xf32>
      %25 = arith.addf %19, %24 : vector<24x48xf32>
      %26 = vector.extract_strided_slice %13 {offsets = [0, 2], sizes = [24, 1], strides = [1, 1]} : vector<24x3xf32> to vector<24x1xf32>
      %27 = vector.extract_strided_slice %14 {offsets = [2, 0], sizes = [1, 48], strides = [1, 1]} : vector<4x48xf32> to vector<1x48xf32>
      %28 = vector.broadcast %26 : vector<24x1xf32> to vector<24x48xf32>
      %29 = vector.broadcast %27 : vector<1x48xf32> to vector<24x48xf32>
      %30 = arith.mulf %28, %29 : vector<24x48xf32>
      %31 = arith.addf %25, %30 : vector<24x48xf32>
      %32 = vector.extract_strided_slice %14 {offsets = [3, 0], sizes = [1, 48], strides = [1, 1]} : vector<4x48xf32> to vector<1x48xf32>
      %33 = vector.broadcast %32 : vector<1x48xf32> to vector<24x48xf32>
      %34 = arith.addf %31, %33 : vector<24x48xf32>
      %35 = math.sin %34 : vector<24x48xf32>
      %c0_9 = arith.constant 0 : index
      %c0_10 = arith.constant 0 : index
      %36 = vector.load %arg3[%c0_9, %c0_10] : memref<24x48xf32, #tpu.memory_space<vmem>>, vector<24x48xf32>
      tpu.vector_store %arg3[%c0_9, %c0_10], %35 {strides = array<i32>} : memref<24x48xf32, #tpu.memory_space<vmem>>, vector<24x48xf32>,
    } else {
    }
    %c16_i32_1 = arith.constant 16 : i32
    %5 = arith.cmpi slt, %0, %c16_i32_1 : i32
    %c16_i32_2 = arith.constant 16 : i32
    %6 = arith.cmpi sgt, %1, %c16_i32_2 : i32
    %7 = arith.andi %5, %6 : i1
    %8 = arith.extui %7 : i1 to i32
    %c0_i32_3 = arith.constant 0 : i32
    %9 = arith.cmpi ne, %8, %c0_i32_3 : i32
    scf.if %9 {
      %c0 = arith.constant 0 : index
      %c0_6 = arith.constant 0 : index
      %13 = vector.load %arg1[%c0, %c0_6] : memref<24x3xf32, #tpu.memory_space<vmem>>, vector<24x3xf32>
      %c0_7 = arith.constant 0 : index
      %c0_8 = arith.constant 0 : index
      %14 = vector.load %arg2[%c0_7, %c0_8] : memref<4x48xf32, #tpu.memory_space<vmem>>, vector<4x48xf32>
      %15 = vector.extract_strided_slice %13 {offsets = [0, 0], sizes = [24, 1], strides = [1, 1]} : vector<24x3xf32> to vector<24x1xf32>
      %16 = vector.extract_strided_slice %14 {offsets = [0, 0], sizes = [1, 48], strides = [1, 1]} : vector<4x48xf32> to vector<1x48xf32>
      %17 = vector.broadcast %15 : vector<24x1xf32> to vector<24x48xf32>
      %18 = vector.broadcast %16 : vector<1x48xf32> to vector<24x48xf32>
      %19 = arith.mulf %17, %18 : vector<24x48xf32>
      %20 = vector.extract_strided_slice %13 {offsets = [0, 1], sizes = [24, 1], strides = [1, 1]} : vector<24x3xf32> to vector<24x1xf32>
      %21 = vector.extract_strided_slice %14 {offsets = [1, 0], sizes = [1, 48], strides = [1, 1]} : vector<4x48xf32> to vector<1x48xf32>
      %22 = vector.broadcast %20 : vector<24x1xf32> to vector<24x48xf32>
      %23 = vector.broadcast %21 : vector<1x48xf32> to vector<24x48xf32>
      %24 = arith.mulf %22, %23 : vector<24x48xf32>
      %25 = arith.addf %19, %24 : vector<24x48xf32>
      %26 = vector.extract_strided_slice %13 {offsets = [0, 2], sizes = [24, 1], strides = [1, 1]} : vector<24x3xf32> to vector<24x1xf32>
      %27 = vector.extract_strided_slice %14 {offsets = [2, 0], sizes = [1, 48], strides = [1, 1]} : vector<4x48xf32> to vector<1x48xf32>
      %28 = vector.broadcast %26 : vector<24x1xf32> to vector<24x48xf32>
      %29 = vector.broadcast %27 : vector<1x48xf32> to vector<24x48xf32>
      %30 = arith.mulf %28, %29 : vector<24x48xf32>
      %31 = arith.addf %25, %30 : vector<24x48xf32>
      %32 = vector.extract_strided_slice %14 {offsets = [3, 0], sizes = [1, 48], strides = [1, 1]} : vector<4x48xf32> to vector<1x48xf32>
      %33 = vector.broadcast %32 : vector<1x48xf32> to vector<24x48xf32>
      %34 = arith.addf %31, %33 : vector<24x48xf32>
      %35 = math.sin %34 : vector<24x48xf32>
      %36 = tpu.iota {dimensions = array<i32: 0>} : vector<24x1xi32>
      %37 = vector.broadcast %0 : i32 to vector<24x1xi32>
      %38 = arith.addi %37, %36 : vector<24x1xi32>
      %c16_i32_9 = arith.constant 16 : i32
      %39 = vector.broadcast %c16_i32_9 : i32 to vector<24x1xi32>
      %40 = arith.cmpi slt, %38, %39 : vector<24x1xi32>
      %cst = arith.constant 0.000000e+00 : f32
      %41 = vector.broadcast %cst : f32 to vector<24x48xf32>
      %42 = vector.shape_cast %40 : vector<24x1xi1> to vector<24x1xi1>
      %43 = vector.broadcast %42 : vector<24x1xi1> to vector<24x48xi1>
      %44 = arith.select %43, %35, %41 : vector<24x48xi1>, vector<24x48xf32>
      %c0_10 = arith.constant 0 : index
      %c0_11 = arith.constant 0 : index
      %45 = vector.load %arg3[%c0_10, %c0_11] : memref<24x48xf32, #tpu.memory_space<vmem>>, vector<24x48xf32>
      tpu.vector_store %arg3[%c0_10, %c0_11], %44 {strides = array<i32>} : memref<24x48xf32, #tpu.memory_space<vmem>>, vector<24x48xf32>,
    } else {
    }
    %c16_i32_4 = arith.constant 16 : i32
    %10 = arith.cmpi sge, %0, %c16_i32_4 : i32
    %11 = arith.extui %10 : i1 to i32
    %c0_i32_5 = arith.constant 0 : i32
    %12 = arith.cmpi ne, %11, %c0_i32_5 : i32
    scf.if %12 {
      %cst = arith.constant 0.000000e+00 : f32
      %13 = vector.broadcast %cst : f32 to vector<24x48xf32>
      %c0 = arith.constant 0 : index
      %c0_6 = arith.constant 0 : index
      %14 = vector.load %arg3[%c0, %c0_6] : memref<24x48xf32, #tpu.memory_space<vmem>>, vector<24x48xf32>
      tpu.vector_store %arg3[%c0, %c0_6], %13 {strides = array<i32>} : memref<24x48xf32, #tpu.memory_space<vmem>>, vector<24x48xf32>,
    } else {
    }
    return
  }
  func.func @transform_0(%arg0: i32) -> (i32, i32) {
    %c0_i32 = arith.constant 0 : i32
    %0 = arith.minsi %arg0, %c0_i32 : i32
    %c0_i32_0 = arith.constant 0 : i32
    %c0_i32_1 = arith.constant 0 : i32
    return %0, %c0_i32_0 : i32, i32
  }
  func.func @transform_1(%arg0: i32) -> (i32, i32) {
    %c0_i32 = arith.constant 0 : i32
    %c0_i32_0 = arith.constant 0 : i32
    %c0_i32_1 = arith.constant 0 : i32
    return %c0_i32, %c0_i32_0 : i32, i32
  }
  func.func @transform_2(%arg0: i32) -> (i32, i32) {
    %c0_i32 = arith.constant 0 : i32
    %c0_i32_0 = arith.constant 0 : i32
    return %arg0, %c0_i32 : i32, i32
  }
}

</mosaic_0001>

<llo_original>
// kernel: tpu_custom_call.1
$region0: #{tpu_custom_call.1}
  #allocation0 [shape = 'u32[]', space=smem, size = 0x4, offset = 0x4, fixed_abs, tag = 'smem constant byte address 0x4 - core index']
  #allocation1 [shape = 'u32[72,128]{1,0:T(1,128)}', space=vmem, size = 0x9000, scoped, tag = 'internal scratch']
  %s0 = inlined_call_operand.vmem [shape: f32[16,3], index: 0, kind: input, shape index: {}]
  %s1 = inlined_call_operand.vmem [shape: f32[4,48], index: 1, kind: input, shape index: {}]
  %s2 = inlined_call_operand.hbm [shape: f32[17,48], index: 2, kind: output, shape index: {}]
  %s3 = sld [smem:[#allocation0]]
  $region30: #{tpu_custom_call.1} parent=0
    _
  %s5 = ssub.s32 1, %s3
  %s6 = scalar_select 0, %s5, %s3
  $region1: #{tpu_custom_call.1} parent=0
    #allocation2 [shape = 'u8[12288]{0}', space=vmem, size = 0x3000, scoped, tag = 'output window, operand 0, single buffered']
    #allocation3 [shape = 's32[1]{0}', space=sflag, size = 0x4, scoped, tag = 'scoped memory for tpu_custom_call.1']
    %7 = vsyncpa [#allocation3], 0
    // Predicated region
    $region2: #{tpu_custom_call.1} parent=1 // pred_check
      _
    $region3: #{tpu_custom_call.1} parent=1 // pred_check_branch
      %9 = sbr.rel (0) target = $region5
    $region4: #{tpu_custom_call.1} parent=1 // pred_region
      _
    $region5: #{tpu_custom_call.1} parent=1 // pred_fallthru
      _
    // Predicated region
    $region6: #{tpu_custom_call.1} parent=1 // pred_check
      _
    $region7: #{tpu_custom_call.1} parent=1 // pred_check_branch
      %11 = sbr.rel (0) target = $region9
    $region8: #{tpu_custom_call.1} parent=1 // pred_region
      _
    $region9: #{tpu_custom_call.1} parent=1 // pred_fallthru
      _
    %s12 = smul.u32 0, 24
    %s13 = sadd.s32 %s12, 24
    %p14 = scmp.le.s32.totalorder %s13, 16
    // Predicated region
    $region10: #{tpu_custom_call.1} parent=1 // pred_check
      %p15 = pneg %p14
    $region11: #{tpu_custom_call.1} parent=1 // pred_check_branch
      %17 = sbr.rel (%p15) target = $region13
    $region12: #{tpu_custom_call.1} parent=1 // pred_region
      %v18 = vld [vmem:[%s0] sm:$0xff]
      %v19 = vld [vmem:[%s0 + $0x8] sm:$0xff]
      %v20 = vld [vmem:[%s0 + $0x10] sm:$0xff]
      %v21 = vld [vmem:[%s1] sm:$0xf]
      %23 = vset.pattern.permute.xlu0 0
      %24 = vperm.xlu0 %23, %v18
      %v25 = vpop.permute.xlu0 %24
      %28 = vset.pattern.permute.xlu0 0
      %29 = vperm.xlu0 %28, %v19
      %v30 = vpop.permute.xlu0 %29
      %33 = vset.pattern.permute.xlu0 0
      %34 = vperm.xlu0 %33, %v20
      %v35 = vpop.permute.xlu0 %34
      %v37 = vperm.slane %v21, 0
      %v38 = vmul.f32 %v25, %v37
      %v39 = vmul.f32 %v30, %v37
      %v40 = vmul.f32 %v35, %v37
      %41 = vset.pattern.permute.xlu0 1
      %42 = vperm.xlu0 %41, %v18
      %v43 = vpop.permute.xlu0 %42
      %45 = vset.pattern.permute.xlu0 1
      %46 = vperm.xlu0 %45, %v19
      %v47 = vpop.permute.xlu0 %46
      %49 = vset.pattern.permute.xlu0 1
      %50 = vperm.xlu0 %49, %v20
      %v51 = vpop.permute.xlu0 %50
      %v53 = vperm.slane %v21, 1
      %v54 = vmul.f32 %v43, %v53
      %v55 = vmul.f32 %v47, %v53
      %v56 = vmul.f32 %v51, %v53
      %v57 = vadd.f32 %v38, %v54
      %v58 = vadd.f32 %v39, %v55
      %v59 = vadd.f32 %v40, %v56
      %60 = vset.pattern.permute.xlu0 2
      %61 = vperm.xlu0 %60, %v18
      %v62 = vpop.permute.xlu0 %61
      %64 = vset.pattern.permute.xlu0 2
      %65 = vperm.xlu0 %64, %v19
      %v66 = vpop.permute.xlu0 %65
      %68 = vset.pattern.permute.xlu0 2
      %69 = vperm.xlu0 %68, %v20
      %v70 = vpop.permute.xlu0 %69
      %v72 = vperm.slane %v21, 2
      %v73 = vmul.f32 %v62, %v72
      %v74 = vmul.f32 %v66, %v72
      %v75 = vmul.f32 %v70, %v72
      %v76 = vadd.f32 %v57, %v73
      %v77 = vadd.f32 %v58, %v74
      %v78 = vadd.f32 %v59, %v75
      %v79 = vperm.slane %v21, 3
      %v80 = vadd.f32 %v76, %v79
      %v81 = vadd.f32 %v77, %v79
      %v82 = vadd.f32 %v78, %v79
      %v83 = vand.u32 2147483647, %v80
      %vm84 = vcmp.le.f32.partialorder %v83, 0.7853982
      %vm85 = vcmp.lt.s32.totalorder %v80, 0
      %v86 = vand.u32 %v80, 2139095040
      %v87 = vshrl.u32 %v86, 23
      %v88 = vsub.s32 %v87, 127
      %v89 = vand.u32 2147483647, %v80
      %v90 = vand.u32 %v89, 8388607
      %v91 = vor.u32 %v90, 8388608
      %v92 = vsub.s32 0, %v91
      %v93 = vadd.s32 %v88, 1
      %vm94 = vcmp.gt.s32.totalorder %v93, 0
      %v95 = vsel %vm94, %v93, 0
      %v96 = vshrl.u32 %v95, 5
      %v97 = vand.u32 %v95, 31
      %v98 = vsub.s32 32, %v97
      %v99 = vshrl.u32 683565275, %v98
      %v100 = vshll.u32 683565275, %v97
      %v101 = vshrl.u32 2475754826, %v98
      %v102 = vor.u32 %v100, %v101
      %v103 = vshll.u32 2475754826, %v97
      %v104 = vshrl.u32 2131351028, %v98
      %v105 = vor.u32 %v103, %v104
      %v106 = vshll.u32 2131351028, %v97
      %v107 = vshrl.u32 2102212464, %v98
      %v108 = vor.u32 %v106, %v107
      %v109 = vshll.u32 2102212464, %v97
      %v110 = vshrl.u32 920167782, %v98
      %v111 = vor.u32 %v109, %v110
      %v112 = vshll.u32 920167782, %v97
      %v113 = vshrl.u32 1326507024, %v98
      %v114 = vor.u32 %v112, %v113
      %vm115 = vcmp.lt.s32.totalorder %v96, 1
      %vm116 = vcmp.lt.s32.totalorder %v96, 2
      %vm117 = vcmp.lt.s32.totalorder %v96, 3
      %vm118 = vcmp.lt.s32.totalorder %v96, 4
      %v119 = vsel %vm115, %v99, %v102
      %v120 = vsel %vm118, %v108, 2102212464
      %v121 = vsel %vm117, %v105, %v120
      %v122 = vsel %vm116, %v119, %v121
      %v123 = vsel %vm115, %v102, %v105
      %v124 = vsel %vm118, %v111, 920167782
      %v125 = vsel %vm117, %v108, %v124
      %v126 = vsel %vm116, %v123, %v125
      %v127 = vsel %vm115, %v105, %v108
      %v128 = vsel %vm118, %v114, 1326507024
      %v129 = vsel %vm117, %v111, %v128
      %v130 = vsel %vm116, %v127, %v129
      %v131 = vshll.u32 %v91, 8
      %v132 = vand.u32 %v131, 65535
      %v133 = vshrl.u32 %v131, 16
      %v134 = vand.u32 %v130, 65535
      %v135 = vshrl.u32 %v130, 16
      %v136 = vmul.u32 %v132, %v134
      %v137 = vmul.u32 %v132, %v135
      %v138 = vmul.u32 %v133, %v134
      %v139 = vmul.u32 %v133, %v135
      %v140 = vshll.u32 %v137, 16
      %v141 = vshrl.u32 %v137, 16
      %v142 = vshll.u32 %v138, 16
      %v143 = vshrl.u32 %v138, 16
      %vm144 = vc.u32 %v136, %v140
      %v145 = vsel %vm144, 1, 0
      %v146 = vadd.s32 %v136, %v140
      %v147 = vadd.s32 %v139, %v145
      %vm148 = vc.u32 %v146, %v142
      %v149 = vsel %vm148, 1, 0
      %v150 = vadd.s32 %v146, %v142
      %v151 = vadd.s32 %v147, %v149
      %v152 = vadd.s32 %v151, %v141
      %v153 = vadd.s32 %v152, %v143
      %v154 = vand.u32 %v131, 65535
      %v155 = vshrl.u32 %v131, 16
      %v156 = vand.u32 %v126, 65535
      %v157 = vshrl.u32 %v126, 16
      %v158 = vmul.u32 %v154, %v156
      %v159 = vmul.u32 %v154, %v157
      %v160 = vmul.u32 %v155, %v156
      %v161 = vmul.u32 %v155, %v157
      %v162 = vshll.u32 %v159, 16
      %v163 = vshrl.u32 %v159, 16
      %v164 = vshll.u32 %v160, 16
      %v165 = vshrl.u32 %v160, 16
      %vm166 = vc.u32 %v158, %v162
      %v167 = vsel %vm166, 1, 0
      %v168 = vadd.s32 %v158, %v162
      %v169 = vadd.s32 %v161, %v167
      %vm170 = vc.u32 %v168, %v164
      %v171 = vsel %vm170, 1, 0
      %v172 = vadd.s32 %v168, %v164
      %v173 = vadd.s32 %v169, %v171
      %v174 = vadd.s32 %v173, %v163
      %v175 = vadd.s32 %v174, %v165
      %v176 = vmul.u32 %v131, %v122
      %v177 = vadd.s32 %v153, %v172
      %vm178 = vc.u32 %v153, %v172
      %v179 = vadd.s32 %v175, 1
      %v180 = vsel %vm178, %v179, %v175
      %v181 = vadd.s32 %v176, %v180
      %v182 = vadd.s32 %v181, 536870912
      %v183 = vshrl.u32 %v182, 30
      %v184 = vshll.u32 %v183, 30
      %v185 = vsub.s32 %v181, %v184
      %vm186 = vcmp.lt.s32.totalorder %v185, 0
      %v187 = vsub.s32 0, %v185
      %v188 = vsel %vm186, %v187, %v185
      %v189 = vclz %v188
      %v190 = vsub.s32 %v189, 2
      %vm191 = vcmp.gt.s32.totalorder 0, %v190
      %v192 = vsel %vm191, 0, %v190
      %v193 = vsub.s32 32, %v192
      %v194 = vshll.u32 %v185, %v192
      %v195 = vshrl.u32 %v177, %v193
      %v196 = vor.u32 %v194, %v195
      %v197 = vsub.s32 4294967266, %v192
      %v198 = vadd.s32 %v197, 127
      %v199 = vshll.u32 %v198, 23
      %v200 = vor.u32 4788187, %v199
      %v201 = vand.u32 2147483647, %v200
      %v203 = vcvt.s32.f32 %v196
      %v204 = vmul.f32 %v203, %v201
      %v205 = vxor.u32 %v204, 2147483648
      %v206 = vsel %vm85, %v205, %v204
      %v207 = vsub.s32 4, %v183
      %v208 = vsel %vm85, %v207, %v183
      %v209 = vsel %vm84, %v80, %v206
      %v210 = vsel %vm84, 0, %v208
      %v211 = vmul.f32 %v209, %v209
      %v212 = vmul.f32 %v211, -0.001358992
      %v213 = vadd.f32 %v212, 0.041655596
      %v214 = vmul.f32 %v211, %v213
      %v215 = vadd.f32 %v214, -0.4999988
      %v216 = vmul.f32 %v211, %v215
      %v217 = vadd.f32 1.0, %v216
      %v218 = vmul.f32 %v209, %v209
      %v219 = vmul.f32 %v218, -0.00019511016
      %v220 = vadd.f32 %v219, 0.008332121
      %v221 = vmul.f32 %v218, %v220
      %v222 = vadd.f32 %v221, -0.16666654
      %v223 = vmul.f32 %v218, %v222
      %v224 = vadd.f32 %v223, 1.0
      %v225 = vmul.f32 %v224, %v209
      %vm226 = vweird.f32 %v80
      %v227 = vadd.s32 %v210, 3
      %v228 = vand.u32 %v227, 3
      %vm229 = vcmp.lt.s32.totalorder %v228, 2
      %vm230 = vcmp.eq.s32.totalorder %v228, 0
      %v231 = vxor.u32 %v225, 2147483648
      %v232 = vsel %vm230, %v217, %v231
      %vm233 = vcmp.eq.s32.totalorder %v228, 2
      %v234 = vxor.u32 %v217, 2147483648
      %v235 = vsel %vm233, %v234, %v225
      %v236 = vsel %vm229, %v232, %v235
      %v237 = vsel %vm226, nan, %v236
      %v238 = vand.u32 2147483647, %v81
      %vm239 = vcmp.le.f32.partialorder %v238, 0.7853982
      %vm240 = vcmp.lt.s32.totalorder %v81, 0
      %v241 = vand.u32 %v81, 2139095040
      %v242 = vshrl.u32 %v241, 23
      %v243 = vsub.s32 %v242, 127
      %v244 = vand.u32 2147483647, %v81
      %v245 = vand.u32 %v244, 8388607
      %v246 = vor.u32 %v245, 8388608
      %v247 = vsub.s32 0, %v246
      %v248 = vadd.s32 %v243, 1
      %vm249 = vcmp.gt.s32.totalorder %v248, 0
      %v250 = vsel %vm249, %v248, 0
      %v251 = vshrl.u32 %v250, 5
      %v252 = vand.u32 %v250, 31
      %v253 = vsub.s32 32, %v252
      %v254 = vshrl.u32 683565275, %v253
      %v255 = vshll.u32 683565275, %v252
      %v256 = vshrl.u32 2475754826, %v253
      %v257 = vor.u32 %v255, %v256
      %v258 = vshll.u32 2475754826, %v252
      %v259 = vshrl.u32 2131351028, %v253
      %v260 = vor.u32 %v258, %v259
      %v261 = vshll.u32 2131351028, %v252
      %v262 = vshrl.u32 2102212464, %v253
      %v263 = vor.u32 %v261, %v262
      %v264 = vshll.u32 2102212464, %v252
      %v265 = vshrl.u32 920167782, %v253
      %v266 = vor.u32 %v264, %v265
      %v267 = vshll.u32 920167782, %v252
      %v268 = vshrl.u32 1326507024, %v253
      %v269 = vor.u32 %v267, %v268
      %vm270 = vcmp.lt.s32.totalorder %v251, 1
      %vm271 = vcmp.lt.s32.totalorder %v251, 2
      %vm272 = vcmp.lt.s32.totalorder %v251, 3
      %vm273 = vcmp.lt.s32.totalorder %v251, 4
      %v274 = vsel %vm270, %v254, %v257
      %v275 = vsel %vm273, %v263, 2102212464
      %v276 = vsel %vm272, %v260, %v275
      %v277 = vsel %vm271, %v274, %v276
      %v278 = vsel %vm270, %v257, %v260
      %v279 = vsel %vm273, %v266, 920167782
      %v280 = vsel %vm272, %v263, %v279
      %v281 = vsel %vm271, %v278, %v280
      %v282 = vsel %vm270, %v260, %v263
      %v283 = vsel %vm273, %v269, 1326507024
      %v284 = vsel %vm272, %v266, %v283
      %v285 = vsel %vm271, %v282, %v284
      %v286 = vshll.u32 %v246, 8
      %v287 = vand.u32 %v286, 65535
      %v288 = vshrl.u32 %v286, 16
      %v289 = vand.u32 %v285, 65535
      %v290 = vshrl.u32 %v285, 16
      %v291 = vmul.u32 %v287, %v289
      %v292 = vmul.u32 %v287, %v290
      %v293 = vmul.u32 %v288, %v289
      %v294 = vmul.u32 %v288, %v290
      %v295 = vshll.u32 %v292, 16
      %v296 = vshrl.u32 %v292, 16
      %v297 = vshll.u32 %v293, 16
      %v298 = vshrl.u32 %v293, 16
      %vm299 = vc.u32 %v291, %v295
      %v300 = vsel %vm299, 1, 0
      %v301 = vadd.s32 %v291, %v295
      %v302 = vadd.s32 %v294, %v300
      %vm303 = vc.u32 %v301, %v297
      %v304 = vsel %vm303, 1, 0
      %v305 = vadd.s32 %v301, %v297
      %v306 = vadd.s32 %v302, %v304
      %v307 = vadd.s32 %v306, %v296
      %v308 = vadd.s32 %v307, %v298
      %v309 = vand.u32 %v286, 65535
      %v310 = vshrl.u32 %v286, 16
      %v311 = vand.u32 %v281, 65535
      %v312 = vshrl.u32 %v281, 16
      %v313 = vmul.u32 %v309, %v311
      %v314 = vmul.u32 %v309, %v312
      %v315 = vmul.u32 %v310, %v311
      %v316 = vmul.u32 %v310, %v312
      %v317 = vshll.u32 %v314, 16
      %v318 = vshrl.u32 %v314, 16
      %v319 = vshll.u32 %v315, 16
      %v320 = vshrl.u32 %v315, 16
      %vm321 = vc.u32 %v313, %v317
      %v322 = vsel %vm321, 1, 0
      %v323 = vadd.s32 %v313, %v317
      %v324 = vadd.s32 %v316, %v322
      %vm325 = vc.u32 %v323, %v319
      %v326 = vsel %vm325, 1, 0
      %v327 = vadd.s32 %v323, %v319
      %v328 = vadd.s32 %v324, %v326
      %v329 = vadd.s32 %v328, %v318
      %v330 = vadd.s32 %v329, %v320
      %v331 = vmul.u32 %v286, %v277
      %v332 = vadd.s32 %v308, %v327
      %vm333 = vc.u32 %v308, %v327
      %v334 = vadd.s32 %v330, 1
      %v335 = vsel %vm333, %v334, %v330
      %v336 = vadd.s32 %v331, %v335
      %v337 = vadd.s32 %v336, 536870912
      %v338 = vshrl.u32 %v337, 30
      %v339 = vshll.u32 %v338, 30
      %v340 = vsub.s32 %v336, %v339
      %vm341 = vcmp.lt.s32.totalorder %v340, 0
      %v342 = vsub.s32 0, %v340
      %v343 = vsel %vm341, %v342, %v340
      %v344 = vclz %v343
      %v345 = vsub.s32 %v344, 2
      %vm346 = vcmp.gt.s32.totalorder 0, %v345
      %v347 = vsel %vm346, 0, %v345
      %v348 = vsub.s32 32, %v347
      %v349 = vshll.u32 %v340, %v347
      %v350 = vshrl.u32 %v332, %v348
      %v351 = vor.u32 %v349, %v350
      %v352 = vsub.s32 4294967266, %v347
      %v353 = vadd.s32 %v352, 127
      %v354 = vshll.u32 %v353, 23
      %v355 = vor.u32 4788187, %v354
      %v356 = vand.u32 2147483647, %v355
      %v358 = vcvt.s32.f32 %v351
      %v359 = vmul.f32 %v358, %v356
      %v360 = vxor.u32 %v359, 2147483648
      %v361 = vsel %vm240, %v360, %v359
      %v362 = vsub.s32 4, %v338
      %v363 = vsel %vm240, %v362, %v338
      %v364 = vsel %vm239, %v81, %v361
      %v365 = vsel %vm239, 0, %v363
      %v366 = vmul.f32 %v364, %v364
      %v367 = vmul.f32 %v366, -0.001358992
      %v368 = vadd.f32 %v367, 0.041655596
      %v369 = vmul.f32 %v366, %v368
      %v370 = vadd.f32 %v369, -0.4999988
      %v371 = vmul.f32 %v366, %v370
      %v372 = vadd.f32 1.0, %v371
      %v373 = vmul.f32 %v364, %v364
      %v374 = vmul.f32 %v373, -0.00019511016
      %v375 = vadd.f32 %v374, 0.008332121
      %v376 = vmul.f32 %v373, %v375
      %v377 = vadd.f32 %v376, -0.16666654
      %v378 = vmul.f32 %v373, %v377
      %v379 = vadd.f32 %v378, 1.0
      %v380 = vmul.f32 %v379, %v364
      %vm381 = vweird.f32 %v81
      %v382 = vadd.s32 %v365, 3
      %v383 = vand.u32 %v382, 3
      %vm384 = vcmp.lt.s32.totalorder %v383, 2
      %vm385 = vcmp.eq.s32.totalorder %v383, 0
      %v386 = vxor.u32 %v380, 2147483648
      %v387 = vsel %vm385, %v372, %v386
      %vm388 = vcmp.eq.s32.totalorder %v383, 2
      %v389 = vxor.u32 %v372, 2147483648
      %v390 = vsel %vm388, %v389, %v380
      %v391 = vsel %vm384, %v387, %v390
      %v392 = vsel %vm381, nan, %v391
      %v393 = vand.u32 2147483647, %v82
      %vm394 = vcmp.le.f32.partialorder %v393, 0.7853982
      %vm395 = vcmp.lt.s32.totalorder %v82, 0
      %v396 = vand.u32 %v82, 2139095040
      %v397 = vshrl.u32 %v396, 23
      %v398 = vsub.s32 %v397, 127
      %v399 = vand.u32 2147483647, %v82
      %v400 = vand.u32 %v399, 8388607
      %v401 = vor.u32 %v400, 8388608
      %v402 = vsub.s32 0, %v401
      %v403 = vadd.s32 %v398, 1
      %vm404 = vcmp.gt.s32.totalorder %v403, 0
      %v405 = vsel %vm404, %v403, 0
      %v406 = vshrl.u32 %v405, 5
      %v407 = vand.u32 %v405, 31
      %v408 = vsub.s32 32, %v407
      %v409 = vshrl.u32 683565275, %v408
      %v410 = vshll.u32 683565275, %v407
      %v411 = vshrl.u32 2475754826, %v408
      %v412 = vor.u32 %v410, %v411
      %v413 = vshll.u32 2475754826, %v407
      %v414 = vshrl.u32 2131351028, %v408
      %v415 = vor.u32 %v413, %v414
      %v416 = vshll.u32 2131351028, %v407
      %v417 = vshrl.u32 2102212464, %v408
      %v418 = vor.u32 %v416, %v417
      %v419 = vshll.u32 2102212464, %v407
      %v420 = vshrl.u32 920167782, %v408
      %v421 = vor.u32 %v419, %v420
      %v422 = vshll.u32 920167782, %v407
      %v423 = vshrl.u32 1326507024, %v408
      %v424 = vor.u32 %v422, %v423
      %vm425 = vcmp.lt.s32.totalorder %v406, 1
      %vm426 = vcmp.lt.s32.totalorder %v406, 2
      %vm427 = vcmp.lt.s32.totalorder %v406, 3
      %vm428 = vcmp.lt.s32.totalorder %v406, 4
      %v429 = vsel %vm425, %v409, %v412
      %v430 = vsel %vm428, %v418, 2102212464
      %v431 = vsel %vm427, %v415, %v430
      %v432 = vsel %vm426, %v429, %v431
      %v433 = vsel %vm425, %v412, %v415
      %v434 = vsel %vm428, %v421, 920167782
      %v435 = vsel %vm427, %v418, %v434
      %v436 = vsel %vm426, %v433, %v435
      %v437 = vsel %vm425, %v415, %v418
      %v438 = vsel %vm428, %v424, 1326507024
      %v439 = vsel %vm427, %v421, %v438
      %v440 = vsel %vm426, %v437, %v439
      %v441 = vshll.u32 %v401, 8
      %v442 = vand.u32 %v441, 65535
      %v443 = vshrl.u32 %v441, 16
      %v444 = vand.u32 %v440, 65535
      %v445 = vshrl.u32 %v440, 16
      %v446 = vmul.u32 %v442, %v444
      %v447 = vmul.u32 %v442, %v445
      %v448 = vmul.u32 %v443, %v444
      %v449 = vmul.u32 %v443, %v445
      %v450 = vshll.u32 %v447, 16
      %v451 = vshrl.u32 %v447, 16
      %v452 = vshll.u32 %v448, 16
      %v453 = vshrl.u32 %v448, 16
      %vm454 = vc.u32 %v446, %v450
      %v455 = vsel %vm454, 1, 0
      %v456 = vadd.s32 %v446, %v450
      %v457 = vadd.s32 %v449, %v455
      %vm458 = vc.u32 %v456, %v452
      %v459 = vsel %vm458, 1, 0
      %v460 = vadd.s32 %v456, %v452
      %v461 = vadd.s32 %v457, %v459
      %v462 = vadd.s32 %v461, %v451
      %v463 = vadd.s32 %v462, %v453
      %v464 = vand.u32 %v441, 65535
      %v465 = vshrl.u32 %v441, 16
      %v466 = vand.u32 %v436, 65535
      %v467 = vshrl.u32 %v436, 16
      %v468 = vmul.u32 %v464, %v466
      %v469 = vmul.u32 %v464, %v467
      %v470 = vmul.u32 %v465, %v466
      %v471 = vmul.u32 %v465, %v467
      %v472 = vshll.u32 %v469, 16
      %v473 = vshrl.u32 %v469, 16
      %v474 = vshll.u32 %v470, 16
      %v475 = vshrl.u32 %v470, 16
      %vm476 = vc.u32 %v468, %v472
      %v477 = vsel %vm476, 1, 0
      %v478 = vadd.s32 %v468, %v472
      %v479 = vadd.s32 %v471, %v477
      %vm480 = vc.u32 %v478, %v474
      %v481 = vsel %vm480, 1, 0
      %v482 = vadd.s32 %v478, %v474
      %v483 = vadd.s32 %v479, %v481
      %v484 = vadd.s32 %v483, %v473
      %v485 = vadd.s32 %v484, %v475
      %v486 = vmul.u32 %v441, %v432
      %v487 = vadd.s32 %v463, %v482
      %vm488 = vc.u32 %v463, %v482
      %v489 = vadd.s32 %v485, 1
      %v490 = vsel %vm488, %v489, %v485
      %v491 = vadd.s32 %v486, %v490
      %v492 = vadd.s32 %v491, 536870912
      %v493 = vshrl.u32 %v492, 30
      %v494 = vshll.u32 %v493, 30
      %v495 = vsub.s32 %v491, %v494
      %vm496 = vcmp.lt.s32.totalorder %v495, 0
      %v497 = vsub.s32 0, %v495
      %v498 = vsel %vm496, %v497, %v495
      %v499 = vclz %v498
      %v500 = vsub.s32 %v499, 2
      %vm501 = vcmp.gt.s32.totalorder 0, %v500
      %v502 = vsel %vm501, 0, %v500
      %v503 = vsub.s32 32, %v502
      %v504 = vshll.u32 %v495, %v502
      %v505 = vshrl.u32 %v487, %v503
      %v506 = vor.u32 %v504, %v505
      %v507 = vsub.s32 4294967266, %v502
      %v508 = vadd.s32 %v507, 127
      %v509 = vshll.u32 %v508, 23
      %v510 = vor.u32 4788187, %v509
      %v511 = vand.u32 2147483647, %v510
      %v513 = vcvt.s32.f32 %v506
      %v514 = vmul.f32 %v513, %v511
      %v515 = vxor.u32 %v514, 2147483648
      %v516 = vsel %vm395, %v515, %v514
      %v517 = vsub.s32 4, %v493
      %v518 = vsel %vm395, %v517, %v493
      %v519 = vsel %vm394, %v82, %v516
      %v520 = vsel %vm394, 0, %v518
      %v521 = vmul.f32 %v519, %v519
      %v522 = vmul.f32 %v521, -0.001358992
      %v523 = vadd.f32 %v522, 0.041655596
      %v524 = vmul.f32 %v521, %v523
      %v525 = vadd.f32 %v524, -0.4999988
      %v526 = vmul.f32 %v521, %v525
      %v527 = vadd.f32 1.0, %v526
      %v528 = vmul.f32 %v519, %v519
      %v529 = vmul.f32 %v528, -0.00019511016
      %v530 = vadd.f32 %v529, 0.008332121
      %v531 = vmul.f32 %v528, %v530
      %v532 = vadd.f32 %v531, -0.16666654
      %v533 = vmul.f32 %v528, %v532
      %v534 = vadd.f32 %v533, 1.0
      %v535 = vmul.f32 %v534, %v519
      %vm536 = vweird.f32 %v82
      %v537 = vadd.s32 %v520, 3
      %v538 = vand.u32 %v537, 3
      %vm539 = vcmp.lt.s32.totalorder %v538, 2
      %vm540 = vcmp.eq.s32.totalorder %v538, 0
      %v541 = vxor.u32 %v535, 2147483648
      %v542 = vsel %vm540, %v527, %v541
      %vm543 = vcmp.eq.s32.totalorder %v538, 2
      %v544 = vxor.u32 %v527, 2147483648
      %v545 = vsel %vm543, %v544, %v535
      %v546 = vsel %vm539, %v542, %v545
      %v547 = vsel %vm536, nan, %v546
      %vm548 = vcmask 392192
      %549 = vst.msk [vmem:[#allocation2] sm:$0xff] %vm548, %v237
      %550 = vst.msk [vmem:[#allocation2 + $0x8] sm:$0xff] %vm548, %v392
      %551 = vst.msk [vmem:[#allocation2 + $0x10] sm:$0xff] %vm548, %v547
    $region13: #{tpu_custom_call.1} parent=1 // pred_fallthru
      _
    %p552 = scmp.lt.s32.totalorder %s12, 16
    %p553 = scmp.gt.s32.totalorder %s13, 16
    %p554 = pnand %p552, %p553
    %p555 = pneg %p554
    // Predicated region
    $region14: #{tpu_custom_call.1} parent=1 // pred_check
      _
    $region15: #{tpu_custom_call.1} parent=1 // pred_check_branch
      %557 = sbr.rel (%p554) target = $region17
    $region16: #{tpu_custom_call.1} parent=1 // pred_region
      %v558 = vld [vmem:[%s0] sm:$0xff]
      %v559 = vld [vmem:[%s0 + $0x8] sm:$0xff]
      %v560 = vld [vmem:[%s0 + $0x10] sm:$0xff]
      %v561 = vld [vmem:[%s1] sm:$0xf]
      %563 = vset.pattern.permute.xlu0 0
      %564 = vperm.xlu0 %563, %v558
      %v565 = vpop.permute.xlu0 %564
      %568 = vset.pattern.permute.xlu0 0
      %569 = vperm.xlu0 %568, %v559
      %v570 = vpop.permute.xlu0 %569
      %573 = vset.pattern.permute.xlu0 0
      %574 = vperm.xlu0 %573, %v560
      %v575 = vpop.permute.xlu0 %574
      %v577 = vperm.slane %v561, 0
      %v578 = vmul.f32 %v565, %v577
      %v579 = vmul.f32 %v570, %v577
      %v580 = vmul.f32 %v575, %v577
      %581 = vset.pattern.permute.xlu0 1
      %582 = vperm.xlu0 %581, %v558
      %v583 = vpop.permute.xlu0 %582
      %585 = vset.pattern.permute.xlu0 1
      %586 = vperm.xlu0 %585, %v559
      %v587 = vpop.permute.xlu0 %586
      %589 = vset.pattern.permute.xlu0 1
      %590 = vperm.xlu0 %589, %v560
      %v591 = vpop.permute.xlu0 %590
      %v593 = vperm.slane %v561, 1
      %v594 = vmul.f32 %v583, %v593
      %v595 = vmul.f32 %v587, %v593
      %v596 = vmul.f32 %v591, %v593
      %v597 = vadd.f32 %v578, %v594
      %v598 = vadd.f32 %v579, %v595
      %v599 = vadd.f32 %v580, %v596
      %600 = vset.pattern.permute.xlu0 2
      %601 = vperm.xlu0 %600, %v558
      %v602 = vpop.permute.xlu0 %601
      %604 = vset.pattern.permute.xlu0 2
      %605 = vperm.xlu0 %604, %v559
      %v606 = vpop.permute.xlu0 %605
      %608 = vset.pattern.permute.xlu0 2
      %609 = vperm.xlu0 %608, %v560
      %v610 = vpop.permute.xlu0 %609
      %v612 = vperm.slane %v561, 2
      %v613 = vmul.f32 %v602, %v612
      %v614 = vmul.f32 %v606, %v612
      %v615 = vmul.f32 %v610, %v612
      %v616 = vadd.f32 %v597, %v613
      %v617 = vadd.f32 %v598, %v614
      %v618 = vadd.f32 %v599, %v615
      %v619 = vperm.slane %v561, 3
      %v620 = vadd.f32 %v616, %v619
      %v621 = vadd.f32 %v617, %v619
      %v622 = vadd.f32 %v618, %v619
      %v623 = vand.u32 2147483647, %v620
      %vm624 = vcmp.le.f32.partialorder %v623, 0.7853982
      %vm625 = vcmp.lt.s32.totalorder %v620, 0
      %v626 = vand.u32 %v620, 2139095040
      %v627 = vshrl.u32 %v626, 23
      %v628 = vsub.s32 %v627, 127
      %v629 = vand.u32 2147483647, %v620
      %v630 = vand.u32 %v629, 8388607
      %v631 = vor.u32 %v630, 8388608
      %v632 = vsub.s32 0, %v631
      %v633 = vadd.s32 %v628, 1
      %vm634 = vcmp.gt.s32.totalorder %v633, 0
      %v635 = vsel %vm634, %v633, 0
      %v636 = vshrl.u32 %v635, 5
      %v637 = vand.u32 %v635, 31
      %v638 = vsub.s32 32, %v637
      %v639 = vshrl.u32 683565275, %v638
      %v640 = vshll.u32 683565275, %v637
      %v641 = vshrl.u32 2475754826, %v638
      %v642 = vor.u32 %v640, %v641
      %v643 = vshll.u32 2475754826, %v637
      %v644 = vshrl.u32 2131351028, %v638
      %v645 = vor.u32 %v643, %v644
      %v646 = vshll.u32 2131351028, %v637
      %v647 = vshrl.u32 2102212464, %v638
      %v648 = vor.u32 %v646, %v647
      %v649 = vshll.u32 2102212464, %v637
      %v650 = vshrl.u32 920167782, %v638
      %v651 = vor.u32 %v649, %v650
      %v652 = vshll.u32 920167782, %v637
      %v653 = vshrl.u32 1326507024, %v638
      %v654 = vor.u32 %v652, %v653
      %vm655 = vcmp.lt.s32.totalorder %v636, 1
      %vm656 = vcmp.lt.s32.totalorder %v636, 2
      %vm657 = vcmp.lt.s32.totalorder %v636, 3
      %vm658 = vcmp.lt.s32.totalorder %v636, 4
      %v659 = vsel %vm655, %v639, %v642
      %v660 = vsel %vm658, %v648, 2102212464
      %v661 = vsel %vm657, %v645, %v660
      %v662 = vsel %vm656, %v659, %v661
      %v663 = vsel %vm655, %v642, %v645
      %v664 = vsel %vm658, %v651, 920167782
      %v665 = vsel %vm657, %v648, %v664
      %v666 = vsel %vm656, %v663, %v665
      %v667 = vsel %vm655, %v645, %v648
      %v668 = vsel %vm658, %v654, 1326507024
      %v669 = vsel %vm657, %v651, %v668
      %v670 = vsel %vm656, %v667, %v669
      %v671 = vshll.u32 %v631, 8
      %v672 = vand.u32 %v671, 65535
      %v673 = vshrl.u32 %v671, 16
      %v674 = vand.u32 %v670, 65535
      %v675 = vshrl.u32 %v670, 16
      %v676 = vmul.u32 %v672, %v674
      %v677 = vmul.u32 %v672, %v675
      %v678 = vmul.u32 %v673, %v674
      %v679 = vmul.u32 %v673, %v675
      %v680 = vshll.u32 %v677, 16
      %v681 = vshrl.u32 %v677, 16
      %v682 = vshll.u32 %v678, 16
      %v683 = vshrl.u32 %v678, 16
      %vm684 = vc.u32 %v676, %v680
      %v685 = vsel %vm684, 1, 0
      %v686 = vadd.s32 %v676, %v680
      %v687 = vadd.s32 %v679, %v685
      %vm688 = vc.u32 %v686, %v682
      %v689 = vsel %vm688, 1, 0
      %v690 = vadd.s32 %v686, %v682
      %v691 = vadd.s32 %v687, %v689
      %v692 = vadd.s32 %v691, %v681
      %v693 = vadd.s32 %v692, %v683
      %v694 = vand.u32 %v671, 65535
      %v695 = vshrl.u32 %v671, 16
      %v696 = vand.u32 %v666, 65535
      %v697 = vshrl.u32 %v666, 16
      %v698 = vmul.u32 %v694, %v696
      %v699 = vmul.u32 %v694, %v697
      %v700 = vmul.u32 %v695, %v696
      %v701 = vmul.u32 %v695, %v697
      %v702 = vshll.u32 %v699, 16
      %v703 = vshrl.u32 %v699, 16
      %v704 = vshll.u32 %v700, 16
      %v705 = vshrl.u32 %v700, 16
      %vm706 = vc.u32 %v698, %v702
      %v707 = vsel %vm706, 1, 0
      %v708 = vadd.s32 %v698, %v702
      %v709 = vadd.s32 %v701, %v707
      %vm710 = vc.u32 %v708, %v704
      %v711 = vsel %vm710, 1, 0
      %v712 = vadd.s32 %v708, %v704
      %v713 = vadd.s32 %v709, %v711
      %v714 = vadd.s32 %v713, %v703
      %v715 = vadd.s32 %v714, %v705
      %v716 = vmul.u32 %v671, %v662
      %v717 = vadd.s32 %v693, %v712
      %vm718 = vc.u32 %v693, %v712
      %v719 = vadd.s32 %v715, 1
      %v720 = vsel %vm718, %v719, %v715
      %v721 = vadd.s32 %v716, %v720
      %v722 = vadd.s32 %v721, 536870912
      %v723 = vshrl.u32 %v722, 30
      %v724 = vshll.u32 %v723, 30
      %v725 = vsub.s32 %v721, %v724
      %vm726 = vcmp.lt.s32.totalorder %v725, 0
      %v727 = vsub.s32 0, %v725
      %v728 = vsel %vm726, %v727, %v725
      %v729 = vclz %v728
      %v730 = vsub.s32 %v729, 2
      %vm731 = vcmp.gt.s32.totalorder 0, %v730
      %v732 = vsel %vm731, 0, %v730
      %v733 = vsub.s32 32, %v732
      %v734 = vshll.u32 %v725, %v732
      %v735 = vshrl.u32 %v717, %v733
      %v736 = vor.u32 %v734, %v735
      %v737 = vsub.s32 4294967266, %v732
      %v738 = vadd.s32 %v737, 127
      %v739 = vshll.u32 %v738, 23
      %v740 = vor.u32 4788187, %v739
      %v741 = vand.u32 2147483647, %v740
      %v743 = vcvt.s32.f32 %v736
      %v744 = vmul.f32 %v743, %v741
      %v745 = vxor.u32 %v744, 2147483648
      %v746 = vsel %vm625, %v745, %v744
      %v747 = vsub.s32 4, %v723
      %v748 = vsel %vm625, %v747, %v723
      %v749 = vsel %vm624, %v620, %v746
      %v750 = vsel %vm624, 0, %v748
      %v751 = vmul.f32 %v749, %v749
      %v752 = vmul.f32 %v751, -0.001358992
      %v753 = vadd.f32 %v752, 0.041655596
      %v754 = vmul.f32 %v751, %v753
      %v755 = vadd.f32 %v754, -0.4999988
      %v756 = vmul.f32 %v751, %v755
      %v757 = vadd.f32 1.0, %v756
      %v758 = vmul.f32 %v749, %v749
      %v759 = vmul.f32 %v758, -0.00019511016
      %v760 = vadd.f32 %v759, 0.008332121
      %v761 = vmul.f32 %v758, %v760
      %v762 = vadd.f32 %v761, -0.16666654
      %v763 = vmul.f32 %v758, %v762
      %v764 = vadd.f32 %v763, 1.0
      %v765 = vmul.f32 %v764, %v749
      %vm766 = vweird.f32 %v620
      %v767 = vadd.s32 %v750, 3
      %v768 = vand.u32 %v767, 3
      %vm769 = vcmp.lt.s32.totalorder %v768, 2
      %vm770 = vcmp.eq.s32.totalorder %v768, 0
      %v771 = vxor.u32 %v765, 2147483648
      %v772 = vsel %vm770, %v757, %v771
      %vm773 = vcmp.eq.s32.totalorder %v768, 2
      %v774 = vxor.u32 %v757, 2147483648
      %v775 = vsel %vm773, %v774, %v765
      %v776 = vsel %vm769, %v772, %v775
      %v777 = vsel %vm766, nan, %v776
      %v778 = vand.u32 2147483647, %v621
      %vm779 = vcmp.le.f32.partialorder %v778, 0.7853982
      %vm780 = vcmp.lt.s32.totalorder %v621, 0
      %v781 = vand.u32 %v621, 2139095040
      %v782 = vshrl.u32 %v781, 23
      %v783 = vsub.s32 %v782, 127
      %v784 = vand.u32 2147483647, %v621
      %v785 = vand.u32 %v784, 8388607
      %v786 = vor.u32 %v785, 8388608
      %v787 = vsub.s32 0, %v786
      %v788 = vadd.s32 %v783, 1
      %vm789 = vcmp.gt.s32.totalorder %v788, 0
      %v790 = vsel %vm789, %v788, 0
      %v791 = vshrl.u32 %v790, 5
      %v792 = vand.u32 %v790, 31
      %v793 = vsub.s32 32, %v792
      %v794 = vshrl.u32 683565275, %v793
      %v795 = vshll.u32 683565275, %v792
      %v796 = vshrl.u32 2475754826, %v793
      %v797 = vor.u32 %v795, %v796
      %v798 = vshll.u32 2475754826, %v792
      %v799 = vshrl.u32 2131351028, %v793
      %v800 = vor.u32 %v798, %v799
      %v801 = vshll.u32 2131351028, %v792
      %v802 = vshrl.u32 2102212464, %v793
      %v803 = vor.u32 %v801, %v802
      %v804 = vshll.u32 2102212464, %v792
      %v805 = vshrl.u32 920167782, %v793
      %v806 = vor.u32 %v804, %v805
      %v807 = vshll.u32 920167782, %v792
      %v808 = vshrl.u32 1326507024, %v793
      %v809 = vor.u32 %v807, %v808
      %vm810 = vcmp.lt.s32.totalorder %v791, 1
      %vm811 = vcmp.lt.s32.totalorder %v791, 2
      %vm812 = vcmp.lt.s32.totalorder %v791, 3
      %vm813 = vcmp.lt.s32.totalorder %v791, 4
      %v814 = vsel %vm810, %v794, %v797
      %v815 = vsel %vm813, %v803, 2102212464
      %v816 = vsel %vm812, %v800, %v815
      %v817 = vsel %vm811, %v814, %v816
      %v818 = vsel %vm810, %v797, %v800
      %v819 = vsel %vm813, %v806, 920167782
      %v820 = vsel %vm812, %v803, %v819
      %v821 = vsel %vm811, %v818, %v820
      %v822 = vsel %vm810, %v800, %v803
      %v823 = vsel %vm813, %v809, 1326507024
      %v824 = vsel %vm812, %v806, %v823
      %v825 = vsel %vm811, %v822, %v824
      %v826 = vshll.u32 %v786, 8
      %v827 = vand.u32 %v826, 65535
      %v828 = vshrl.u32 %v826, 16
      %v829 = vand.u32 %v825, 65535
      %v830 = vshrl.u32 %v825, 16
      %v831 = vmul.u32 %v827, %v829
      %v832 = vmul.u32 %v827, %v830
      %v833 = vmul.u32 %v828, %v829
      %v834 = vmul.u32 %v828, %v830
      %v835 = vshll.u32 %v832, 16
      %v836 = vshrl.u32 %v832, 16
      %v837 = vshll.u32 %v833, 16
      %v838 = vshrl.u32 %v833, 16
      %vm839 = vc.u32 %v831, %v835
      %v840 = vsel %vm839, 1, 0
      %v841 = vadd.s32 %v831, %v835
      %v842 = vadd.s32 %v834, %v840
      %vm843 = vc.u32 %v841, %v837
      %v844 = vsel %vm843, 1, 0
      %v845 = vadd.s32 %v841, %v837
      %v846 = vadd.s32 %v842, %v844
      %v847 = vadd.s32 %v846, %v836
      %v848 = vadd.s32 %v847, %v838
      %v849 = vand.u32 %v826, 65535
      %v850 = vshrl.u32 %v826, 16
      %v851 = vand.u32 %v821, 65535
      %v852 = vshrl.u32 %v821, 16
      %v853 = vmul.u32 %v849, %v851
      %v854 = vmul.u32 %v849, %v852
      %v855 = vmul.u32 %v850, %v851
      %v856 = vmul.u32 %v850, %v852
      %v857 = vshll.u32 %v854, 16
      %v858 = vshrl.u32 %v854, 16
      %v859 = vshll.u32 %v855, 16
      %v860 = vshrl.u32 %v855, 16
      %vm861 = vc.u32 %v853, %v857
      %v862 = vsel %vm861, 1, 0
      %v863 = vadd.s32 %v853, %v857
      %v864 = vadd.s32 %v856, %v862
      %vm865 = vc.u32 %v863, %v859
      %v866 = vsel %vm865, 1, 0
      %v867 = vadd.s32 %v863, %v859
      %v868 = vadd.s32 %v864, %v866
      %v869 = vadd.s32 %v868, %v858
      %v870 = vadd.s32 %v869, %v860
      %v871 = vmul.u32 %v826, %v817
      %v872 = vadd.s32 %v848, %v867
      %vm873 = vc.u32 %v848, %v867
      %v874 = vadd.s32 %v870, 1
      %v875 = vsel %vm873, %v874, %v870
      %v876 = vadd.s32 %v871, %v875
      %v877 = vadd.s32 %v876, 536870912
      %v878 = vshrl.u32 %v877, 30
      %v879 = vshll.u32 %v878, 30
      %v880 = vsub.s32 %v876, %v879
      %vm881 = vcmp.lt.s32.totalorder %v880, 0
      %v882 = vsub.s32 0, %v880
      %v883 = vsel %vm881, %v882, %v880
      %v884 = vclz %v883
      %v885 = vsub.s32 %v884, 2
      %vm886 = vcmp.gt.s32.totalorder 0, %v885
      %v887 = vsel %vm886, 0, %v885
      %v888 = vsub.s32 32, %v887
      %v889 = vshll.u32 %v880, %v887
      %v890 = vshrl.u32 %v872, %v888
      %v891 = vor.u32 %v889, %v890
      %v892 = vsub.s32 4294967266, %v887
      %v893 = vadd.s32 %v892, 127
      %v894 = vshll.u32 %v893, 23
      %v895 = vor.u32 4788187, %v894
      %v896 = vand.u32 2147483647, %v895
      %v898 = vcvt.s32.f32 %v891
      %v899 = vmul.f32 %v898, %v896
      %v900 = vxor.u32 %v899, 2147483648
      %v901 = vsel %vm780, %v900, %v899
      %v902 = vsub.s32 4, %v878
      %v903 = vsel %vm780, %v902, %v878
      %v904 = vsel %vm779, %v621, %v901
      %v905 = vsel %vm779, 0, %v903
      %v906 = vmul.f32 %v904, %v904
      %v907 = vmul.f32 %v906, -0.001358992
      %v908 = vadd.f32 %v907, 0.041655596
      %v909 = vmul.f32 %v906, %v908
      %v910 = vadd.f32 %v909, -0.4999988
      %v911 = vmul.f32 %v906, %v910
      %v912 = vadd.f32 1.0, %v911
      %v913 = vmul.f32 %v904, %v904
      %v914 = vmul.f32 %v913, -0.00019511016
      %v915 = vadd.f32 %v914, 0.008332121
      %v916 = vmul.f32 %v913, %v915
      %v917 = vadd.f32 %v916, -0.16666654
      %v918 = vmul.f32 %v913, %v917
      %v919 = vadd.f32 %v918, 1.0
      %v920 = vmul.f32 %v919, %v904
      %vm921 = vweird.f32 %v621
      %v922 = vadd.s32 %v905, 3
      %v923 = vand.u32 %v922, 3
      %vm924 = vcmp.lt.s32.totalorder %v923, 2
      %vm925 = vcmp.eq.s32.totalorder %v923, 0
      %v926 = vxor.u32 %v920, 2147483648
      %v927 = vsel %vm925, %v912, %v926
      %vm928 = vcmp.eq.s32.totalorder %v923, 2
      %v929 = vxor.u32 %v912, 2147483648
      %v930 = vsel %vm928, %v929, %v920
      %v931 = vsel %vm924, %v927, %v930
      %v932 = vsel %vm921, nan, %v931
      %v933 = vand.u32 2147483647, %v622
      %vm934 = vcmp.le.f32.partialorder %v933, 0.7853982
      %vm935 = vcmp.lt.s32.totalorder %v622, 0
      %v936 = vand.u32 %v622, 2139095040
      %v937 = vshrl.u32 %v936, 23
      %v938 = vsub.s32 %v937, 127
      %v939 = vand.u32 2147483647, %v622
      %v940 = vand.u32 %v939, 8388607
      %v941 = vor.u32 %v940, 8388608
      %v942 = vsub.s32 0, %v941
      %v943 = vadd.s32 %v938, 1
      %vm944 = vcmp.gt.s32.totalorder %v943, 0
      %v945 = vsel %vm944, %v943, 0
      %v946 = vshrl.u32 %v945, 5
      %v947 = vand.u32 %v945, 31
      %v948 = vsub.s32 32, %v947
      %v949 = vshrl.u32 683565275, %v948
      %v950 = vshll.u32 683565275, %v947
      %v951 = vshrl.u32 2475754826, %v948
      %v952 = vor.u32 %v950, %v951
      %v953 = vshll.u32 2475754826, %v947
      %v954 = vshrl.u32 2131351028, %v948
      %v955 = vor.u32 %v953, %v954
      %v956 = vshll.u32 2131351028, %v947
      %v957 = vshrl.u32 2102212464, %v948
      %v958 = vor.u32 %v956, %v957
      %v959 = vshll.u32 2102212464, %v947
      %v960 = vshrl.u32 920167782, %v948
      %v961 = vor.u32 %v959, %v960
      %v962 = vshll.u32 920167782, %v947
      %v963 = vshrl.u32 1326507024, %v948
      %v964 = vor.u32 %v962, %v963
      %vm965 = vcmp.lt.s32.totalorder %v946, 1
      %vm966 = vcmp.lt.s32.totalorder %v946, 2
      %vm967 = vcmp.lt.s32.totalorder %v946, 3
      %vm968 = vcmp.lt.s32.totalorder %v946, 4
      %v969 = vsel %vm965, %v949, %v952
      %v970 = vsel %vm968, %v958, 2102212464
      %v971 = vsel %vm967, %v955, %v970
      %v972 = vsel %vm966, %v969, %v971
      %v973 = vsel %vm965, %v952, %v955
      %v974 = vsel %vm968, %v961, 920167782
      %v975 = vsel %vm967, %v958, %v974
      %v976 = vsel %vm966, %v973, %v975
      %v977 = vsel %vm965, %v955, %v958
      %v978 = vsel %vm968, %v964, 1326507024
      %v979 = vsel %vm967, %v961, %v978
      %v980 = vsel %vm966, %v977, %v979
      %v981 = vshll.u32 %v941, 8
      %v982 = vand.u32 %v981, 65535
      %v983 = vshrl.u32 %v981, 16
      %v984 = vand.u32 %v980, 65535
      %v985 = vshrl.u32 %v980, 16
      %v986 = vmul.u32 %v982, %v984
      %v987 = vmul.u32 %v982, %v985
      %v988 = vmul.u32 %v983, %v984
      %v989 = vmul.u32 %v983, %v985
      %v990 = vshll.u32 %v987, 16
      %v991 = vshrl.u32 %v987, 16
      %v992 = vshll.u32 %v988, 16
      %v993 = vshrl.u32 %v988, 16
      %vm994 = vc.u32 %v986, %v990
      %v995 = vsel %vm994, 1, 0
      %v996 = vadd.s32 %v986, %v990
      %v997 = vadd.s32 %v989, %v995
      %vm998 = vc.u32 %v996, %v992
      %v999 = vsel %vm998, 1, 0
      %v1000 = vadd.s32 %v996, %v992
      %v1001 = vadd.s32 %v997, %v999
      %v1002 = vadd.s32 %v1001, %v991
      %v1003 = vadd.s32 %v1002, %v993
      %v1004 = vand.u32 %v981, 65535
      %v1005 = vshrl.u32 %v981, 16
      %v1006 = vand.u32 %v976, 65535
      %v1007 = vshrl.u32 %v976, 16
      %v1008 = vmul.u32 %v1004, %v1006
      %v1009 = vmul.u32 %v1004, %v1007
      %v1010 = vmul.u32 %v1005, %v1006
      %v1011 = vmul.u32 %v1005, %v1007
      %v1012 = vshll.u32 %v1009, 16
      %v1013 = vshrl.u32 %v1009, 16
      %v1014 = vshll.u32 %v1010, 16
      %v1015 = vshrl.u32 %v1010, 16
      %vm1016 = vc.u32 %v1008, %v1012
      %v1017 = vsel %vm1016, 1, 0
      %v1018 = vadd.s32 %v1008, %v1012
      %v1019 = vadd.s32 %v1011, %v1017
      %vm1020 = vc.u32 %v1018, %v1014
      %v1021 = vsel %vm1020, 1, 0
      %v1022 = vadd.s32 %v1018, %v1014
      %v1023 = vadd.s32 %v1019, %v1021
      %v1024 = vadd.s32 %v1023, %v1013
      %v1025 = vadd.s32 %v1024, %v1015
      %v1026 = vmul.u32 %v981, %v972
      %v1027 = vadd.s32 %v1003, %v1022
      %vm1028 = vc.u32 %v1003, %v1022
      %v1029 = vadd.s32 %v1025, 1
      %v1030 = vsel %vm1028, %v1029, %v1025
      %v1031 = vadd.s32 %v1026, %v1030
      %v1032 = vadd.s32 %v1031, 536870912
      %v1033 = vshrl.u32 %v1032, 30
      %v1034 = vshll.u32 %v1033, 30
      %v1035 = vsub.s32 %v1031, %v1034
      %vm1036 = vcmp.lt.s32.totalorder %v1035, 0
      %v1037 = vsub.s32 0, %v1035
      %v1038 = vsel %vm1036, %v1037, %v1035
      %v1039 = vclz %v1038
      %v1040 = vsub.s32 %v1039, 2
      %vm1041 = vcmp.gt.s32.totalorder 0, %v1040
      %v1042 = vsel %vm1041, 0, %v1040
      %v1043 = vsub.s32 32, %v1042
      %v1044 = vshll.u32 %v1035, %v1042
      %v1045 = vshrl.u32 %v1027, %v1043
      %v1046 = vor.u32 %v1044, %v1045
      %v1047 = vsub.s32 4294967266, %v1042
      %v1048 = vadd.s32 %v1047, 127
      %v1049 = vshll.u32 %v1048, 23
      %v1050 = vor.u32 4788187, %v1049
      %v1051 = vand.u32 2147483647, %v1050
      %v1053 = vcvt.s32.f32 %v1046
      %v1054 = vmul.f32 %v1053, %v1051
      %v1055 = vxor.u32 %v1054, 2147483648
      %v1056 = vsel %vm935, %v1055, %v1054
      %v1057 = vsub.s32 4, %v1033
      %v1058 = vsel %vm935, %v1057, %v1033
      %v1059 = vsel %vm934, %v622, %v1056
      %v1060 = vsel %vm934, 0, %v1058
      %v1061 = vmul.f32 %v1059, %v1059
      %v1062 = vmul.f32 %v1061, -0.001358992
      %v1063 = vadd.f32 %v1062, 0.041655596
      %v1064 = vmul.f32 %v1061, %v1063
      %v1065 = vadd.f32 %v1064, -0.4999988
      %v1066 = vmul.f32 %v1061, %v1065
      %v1067 = vadd.f32 1.0, %v1066
      %v1068 = vmul.f32 %v1059, %v1059
      %v1069 = vmul.f32 %v1068, -0.00019511016
      %v1070 = vadd.f32 %v1069, 0.008332121
      %v1071 = vmul.f32 %v1068, %v1070
      %v1072 = vadd.f32 %v1071, -0.16666654
      %v1073 = vmul.f32 %v1068, %v1072
      %v1074 = vadd.f32 %v1073, 1.0
      %v1075 = vmul.f32 %v1074, %v1059
      %vm1076 = vweird.f32 %v622
      %v1077 = vadd.s32 %v1060, 3
      %v1078 = vand.u32 %v1077, 3
      %vm1079 = vcmp.lt.s32.totalorder %v1078, 2
      %vm1080 = vcmp.eq.s32.totalorder %v1078, 0
      %v1081 = vxor.u32 %v1075, 2147483648
      %v1082 = vsel %vm1080, %v1067, %v1081
      %vm1083 = vcmp.eq.s32.totalorder %v1078, 2
      %v1084 = vxor.u32 %v1067, 2147483648
      %v1085 = vsel %vm1083, %v1084, %v1075
      %v1086 = vsel %vm1079, %v1082, %v1085
      %v1087 = vsel %vm1076, nan, %v1086
      %v1088 = vlaneseq
      %v1089 = vshrl.u32 %v1088, 7
      %v1090 = vadd.s32 %v1089, 8
      %v1091 = vadd.s32 %v1089, 16
      %v1092 = vstv %s12
      %v1093 = vadd.s32 %v1092, %v1089
      %v1094 = vadd.s32 %v1092, %v1090
      %v1095 = vadd.s32 %v1092, %v1091
      %vm1096 = vcmp.lt.s32.totalorder %v1093, 16
      %vm1097 = vcmp.lt.s32.totalorder %v1094, 16
      %vm1098 = vcmp.lt.s32.totalorder %v1095, 16
      %v1099 = vsel %vm1096, 1, 0
      %v1100 = vsel %vm1097, 1, 0
      %v1101 = vsel %vm1098, 1, 0
      %vm1102 = vcmp.eq.s32.totalorder %v1099, 1
      %vm1103 = vcmp.eq.s32.totalorder %v1100, 1
      %vm1104 = vcmp.eq.s32.totalorder %v1101, 1
      %v1105 = vsel %vm1102, %v777, 0.0
      %v1106 = vsel %vm1103, %v932, 0.0
      %v1107 = vsel %vm1104, %v1087, 0.0
      %vm1108 = vcmask 392192
      %1109 = vst.msk [vmem:[#allocation2] sm:$0xff] %vm1108, %v1105
      %1110 = vst.msk [vmem:[#allocation2 + $0x8] sm:$0xff] %vm1108, %v1106
      %1111 = vst.msk [vmem:[#allocation2 + $0x10] sm:$0xff] %vm1108, %v1107
    $region17: #{tpu_custom_call.1} parent=1 // pred_fallthru
      _
    %p1112 = scmp.ge.s32.totalorder %s12, 16
    // Predicated region
    $region18: #{tpu_custom_call.1} parent=1 // pred_check
      %p1113 = pneg %p1112
    $region19: #{tpu_custom_call.1} parent=1 // pred_check_branch
      %1115 = sbr.rel (%p1113) target = $region21
    $region20: #{tpu_custom_call.1} parent=1 // pred_region
      %vm1116 = vcmask 392192
      %1117 = vst.msk [vmem:[#allocation2] sm:$0xff] %vm1116, 0.0
      %1118 = vst.msk [vmem:[#allocation2 + $0x8] sm:$0xff] %vm1116, 0.0
      %1119 = vst.msk [vmem:[#allocation2 + $0x10] sm:$0xff] %vm1116, 0.0
    $region21: #{tpu_custom_call.1} parent=1 // pred_fallthru
      _
    // Predicated region
    $region22: #{tpu_custom_call.1} parent=1 // pred_check
      _
    $region23: #{tpu_custom_call.1} parent=1 // pred_check_branch
      %1121 = sbr.rel (0) target = $region25
    $region24: #{tpu_custom_call.1} parent=1 // pred_region
      %1123 = vsyncadd [#allocation3], 0
      %s1124 = sshll.u32 [#allocation2], 4
      %s1125 = int_to_ptr.vmem [resolvable:$true] %s1124
      %s1126 = sshll.u32 %s2, 4
      %s1127 = int_to_ptr.hbm [resolvable:$true] %s1126
      %1132 = dma.vmem_to_hbm [thread:$0]  %s1125, 384, %s1127, [#allocation3], 128, 128, 8
    $region25: #{tpu_custom_call.1} parent=1 // pred_fallthru
      _
    // Predicated region
    $region26: #{tpu_custom_call.1} parent=1 // pred_check
      _
    $region27: #{tpu_custom_call.1} parent=1 // pred_check_branch
      %1134 = sbr.rel (0) target = $region29
    $region28: #{tpu_custom_call.1} parent=1 // pred_region
      %1136 = dma.done [#allocation3], 384
    $region29: #{tpu_custom_call.1} parent=1 // pred_fallthru
      _
    %1137 = vsyncpa [#allocation3], 1

</llo_original>
